<compile_context>
chip_gen: v7x
topology: tpu7x:2x2x1
jax: 0.10.0
libtpu: 0.0.40
codegen_flags: <defaults>
</compile_context>

<pallas_src>
import functools

import jax
import jax.numpy as jnp
from jax.experimental import pallas as pl
from jax.experimental.pallas import tpu as pltpu


def _round_up(x, m):
    return ((x + m - 1) // m) * m


def _lut_gather_kernel(dist_ref, lut_ref, out_ref, *, cut_dist, pack, e_pad):
    """One batch tile of: out[r, p*H:(p+1)*H] = LUT[idx[r, p]]."""
    tile_r = dist_ref.shape[0]
    width = lut_ref.shape[0]                       # pack * e_pad (contraction)

    # Index computation on the VPU: clamp -> truncate toward zero -> 0-based
    # (matches torch clamp(...).long() - 1 for the clamped positive range).
    d = jnp.clip(dist_ref[...].astype(jnp.float32), 1.0, cut_dist - 1e-6)
    idx = d.astype(jnp.int32) - 1                  # (tile_r, pack) in [0, num_emb)

    # One-hot over the packed LUT rows.  Column j = p * e_pad + e selects
    # embedding e for packed slot p; each column matches at most one slot, so
    # the sum of per-slot compares is an exact 0/1 matrix.
    iota = jax.lax.broadcasted_iota(jnp.int32, (tile_r, width), 1)
    onehot = jnp.zeros((tile_r, width), lut_ref.dtype)
    for p in range(pack):                          # static unroll, pack <= 16
        onehot = onehot + (iota == idx[:, p:p + 1] + p * e_pad).astype(lut_ref.dtype)

    # Gather as a matmul on the (otherwise idle) MXU; exact for 0/1 weights.
    out = jnp.dot(onehot, lut_ref[...], preferred_element_type=jnp.float32)
    out_ref[...] = out.astype(out_ref.dtype)


def prepare_params(embedding, weight, bias, *, lut_dtype=jnp.float32):
    """Fold the DenseLayer into the embedding table ONCE at init time.

    embedding: [num_emb, H]  (nn.Embedding weight, num_emb = cut_dist - 1)
    weight:    [H, H]        (nn.Linear weight, PyTorch [out, in] layout)
    bias:      [H]
    lut_dtype: storage dtype of the fused table (already tiny; bf16 fine on
               v5e/v6e/v7x, output accuracy is set by out_dtype).
    """
    embedding = jnp.asarray(embedding, jnp.float32)
    weight = jnp.asarray(weight, jnp.float32)
    bias = jnp.asarray(bias, jnp.float32)

    lut = jnp.maximum(embedding @ weight.T + bias, 0.0)       # [num_emb, H]
    num_emb, h = lut.shape
    lut = lut.astype(lut_dtype)

    # Pack `pack` logical rows per 128-lane output row when H divides 128, so
    # the kernel writes zero padded columns (e.g. H=32 -> pack=4, no waste).
    if h < 128 and 128 % h == 0 and h >= 8:
        pack = 128 // h
        out_width = 128
    else:
        pack = 1
        out_width = _round_up(h, 128)

    e_pad = _round_up(num_emb, 8)                  # sublane-aligned group stride
    lut_packed = jnp.zeros((pack * e_pad, out_width), lut_dtype)
    for p in range(pack):
        lut_packed = lut_packed.at[p * e_pad:p * e_pad + num_emb,
                                   p * h:(p + 1) * h].set(lut)

    return dict(lut=lut, lut_packed=lut_packed, pack=pack, e_pad=e_pad,
                hidden_dim=h, out_width=out_width)


def distance2embedding(dist_feat, params, *, cut_dist, tile_n=2048,
                       out_dtype=jnp.float32, min_pallas_n=128):
    """Pallas forward of Distance2embedding.

    dist_feat: any shape whose squeeze() is [N] (e.g. [N] or [N, 1]).
    params:    output of prepare_params().
    Returns [..., hidden_dim] in out_dtype matching the PyTorch module output.
    """
    dist_feat = jnp.asarray(dist_feat)
    lead = tuple(s for s in dist_feat.shape if s != 1)        # torch .squeeze()
    d = jnp.reshape(dist_feat, (-1,)).astype(jnp.float32)
    n = d.shape[0]

    lut_packed = params["lut_packed"]
    pack = params["pack"]
    e_pad = params["e_pad"]
    h = params["hidden_dim"]
    out_width = params["out_width"]
    width = pack * e_pad
    cut_dist = float(cut_dist)

    # Tiny problems: pallas_call launch + per-step overhead dominates; a plain
    # XLA gather of the fused LUT is faster and fuses with neighbours.
    if n < min_pallas_n:
        idx = jnp.clip(d, 1.0, cut_dist - 1e-6).astype(jnp.int32) - 1
        out = jnp.take(params["lut"], idx, axis=0).astype(out_dtype)
        return out.reshape(lead + (h,))

    # Tiling: big tiles to amortize per-step overhead, but keep grid >= 2 so
    # the "parallel" batch axis can shard across v7x's two TensorCores.
    n_rows = pl.cdiv(n, pack)                      # packed output rows
    tile_r_target = max(8, _round_up(max(tile_n // pack, 8), 8))
    tile_r = max(8, min(tile_r_target, _round_up(pl.cdiv(n_rows, 2), 8)))
    n_rows_pad = _round_up(n_rows, tile_r)
    n_pad = n_rows_pad * pack
    grid = (n_rows_pad // tile_r,)

    # Ragged tail handled by padding with a valid distance (sliced off below).
    d2 = jnp.pad(d, (0, n_pad - n), constant_values=1.0).reshape(n_rows_pad, pack)

    itemsize_lut = jnp.dtype(lut_packed.dtype).itemsize
    itemsize_out = jnp.dtype(out_dtype).itemsize
    lut_bytes = lut_packed.size * itemsize_lut
    tile_in_bytes = tile_r * pack * 4
    tile_out_bytes = tile_r * out_width * itemsize_out
    scratch_bytes = tile_r * width * itemsize_lut + tile_r * out_width * 4
    needed = lut_bytes + 2 * (tile_in_bytes + tile_out_bytes) + scratch_bytes
    # Cap at 48 MiB: comfortably inside v7x's 64 MiB physical VMEM.
    vmem_limit = int(min(48 << 20, max(16 << 20, 2 * needed)))

    cost = pl.CostEstimate(
        flops=2 * n_rows_pad * width * out_width,
        transcendentals=0,
        bytes_accessed=int(n_rows_pad * pack * 4 + lut_bytes
                           + n_rows_pad * out_width * itemsize_out),
    )

    kernel = functools.partial(_lut_gather_kernel, cut_dist=cut_dist,
                               pack=pack, e_pad=e_pad)

    out_pad = pl.pallas_call(
        kernel,
        out_shape=jax.ShapeDtypeStruct((n_rows_pad, out_width), out_dtype),
        grid_spec=pltpu.PrefetchScalarGridSpec(
            num_scalar_prefetch=0,
            grid=grid,
            in_specs=[
                # streamed distance tile (double-buffered by default)
                pl.BlockSpec((tile_r, pack), lambda i: (i, 0)),
                # grid-invariant fused LUT: resident, single-buffered
                pl.BlockSpec((width, out_width), lambda i: (0, 0),
                             pipeline_mode=pl.Buffered(buffer_count=1)),
            ],
            out_specs=pl.BlockSpec((tile_r, out_width), lambda i: (i, 0)),
        ),
        compiler_params=pltpu.CompilerParams(
            dimension_semantics=("parallel",),
            vmem_limit_bytes=vmem_limit,
        ),
        cost_estimate=cost,
    )(d2, lut_packed)

    # Un-pack / trim only if actually needed (no-ops when shapes already match).
    out = out_pad.reshape(n_pad, out_width // pack)
    if out.shape[0] != n:
        out = out[:n]
    if out.shape[1] != h:
        out = out[:, :h]
    return out.reshape(lead + (h,))


def distance2embedding_ref(dist_feat, embedding, weight, bias, cut_dist):
    """Pure-JAX reference matching the PyTorch module."""
    d = jnp.squeeze(jnp.asarray(dist_feat))
    idx = jnp.clip(d, 1.0, float(cut_dist) - 1e-6).astype(jnp.int32) - 1
    emb = embedding[idx]
    return jnp.maximum(emb @ weight.T + bias, 0.0)


if __name__ == "__main__":
    key = jax.random.PRNGKey(0)
    N, H = 512, 32            # N edges/distances, hidden_dim = 32
    cut_dist = 5.0
    num_emb = int(cut_dist) - 1

    k1, k2, k3, k4 = jax.random.split(key, 4)
    dist_feat = jax.random.uniform(k1, (N, 1), minval=0.0, maxval=cut_dist + 1.0,
                                   dtype=jnp.float32)
    embedding = jax.random.normal(k2, (num_emb, H), dtype=jnp.float32)
    bound = 1.0 / (H ** 0.5)  # nn.Linear-style init
    weight = jax.random.uniform(k3, (H, H), minval=-bound, maxval=bound,
                                dtype=jnp.float32)
    bias = jax.random.uniform(k4, (H,), minval=-bound, maxval=bound,
                              dtype=jnp.float32)

    # Parameter prep (DenseLayer folded into the table) happens once at init.
    params = prepare_params(embedding, weight, bias)

    out = distance2embedding(dist_feat, params, cut_dist=cut_dist)
    out = jax.block_until_ready(out)

    ref = distance2embedding_ref(dist_feat, embedding, weight, bias, cut_dist)
    assert out.shape == ref.shape == (N, H), (out.shape, ref.shape)
    assert jnp.allclose(out, ref, atol=1e-4, rtol=1e-4), "mismatch vs reference"

    print("KERNEL_OK")
</pallas_src>

<mosaic_0001>
module attributes {stable_mosaic.version = 11 : i64} {
  func.func @_lut_gather_kernel(%arg0: i32, %arg1: memref<64x4xf32, #tpu.memory_space<vmem>>, %arg2: memref<32x128xf32, #tpu.memory_space<vmem>>, %arg3: memref<64x128xf32, #tpu.memory_space<vmem>>) attributes {dimension_semantics = [#tpu.dimension_semantics<parallel>], iteration_bounds = array<i64: 2>, scalar_prefetch = 0 : i64, scratch_operands = 0 : i64, tpu.core_type = #tpu.core_type<tc>, window_params = [{transform_indices = @transform_0, window_bounds = array<i64: 64, 4>}, {pipeline_mode = #tpu.pipeline_mode<synchronous>, transform_indices = @transform_1, window_bounds = array<i64: 32, 128>}, {transform_indices = @transform_2, window_bounds = array<i64: 64, 128>}]} {
    %c0 = arith.constant 0 : index
    %c0_0 = arith.constant 0 : index
    %0 = vector.load %arg1[%c0, %c0_0] : memref<64x4xf32, #tpu.memory_space<vmem>>, vector<64x4xf32>
    %cst = arith.constant 1.000000e+00 : f32
    %cst_1 = arith.constant 4.99999905 : f32
    %1 = vector.broadcast %cst : f32 to vector<64x4xf32>
    %2 = arith.maximumf %1, %0 : vector<64x4xf32>
    %3 = vector.broadcast %cst_1 : f32 to vector<64x4xf32>
    %4 = arith.minimumf %3, %2 : vector<64x4xf32>
    %5 = arith.fptosi %4 : vector<64x4xf32> to vector<64x4xi32>
    %c1_i32 = arith.constant 1 : i32
    %6 = vector.broadcast %c1_i32 : i32 to vector<64x4xi32>
    %7 = arith.subi %5, %6 : vector<64x4xi32>
    %8 = tpu.iota {dimensions = array<i32: 1>} : vector<64x32xi32>
    %cst_2 = arith.constant 0.000000e+00 : f32
    %9 = vector.broadcast %cst_2 : f32 to vector<64x32xf32>
    %10 = vector.extract_strided_slice %7 {offsets = [0, 0], sizes = [64, 1], strides = [1, 1]} : vector<64x4xi32> to vector<64x1xi32>
    %c0_i32 = arith.constant 0 : i32
    %11 = vector.broadcast %c0_i32 : i32 to vector<64x1xi32>
    %12 = arith.addi %10, %11 : vector<64x1xi32>
    %13 = vector.broadcast %12 : vector<64x1xi32> to vector<64x32xi32>
    %14 = arith.cmpi eq, %8, %13 : vector<64x32xi32>
    %15 = arith.extui %14 : vector<64x32xi1> to vector<64x32xi32>
    %16 = arith.sitofp %15 : vector<64x32xi32> to vector<64x32xf32>
    %17 = arith.addf %9, %16 : vector<64x32xf32>
    %18 = vector.extract_strided_slice %7 {offsets = [0, 1], sizes = [64, 1], strides = [1, 1]} : vector<64x4xi32> to vector<64x1xi32>
    %c8_i32 = arith.constant 8 : i32
    %19 = vector.broadcast %c8_i32 : i32 to vector<64x1xi32>
    %20 = arith.addi %18, %19 : vector<64x1xi32>
    %21 = vector.broadcast %20 : vector<64x1xi32> to vector<64x32xi32>
    %22 = arith.cmpi eq, %8, %21 : vector<64x32xi32>
    %23 = arith.extui %22 : vector<64x32xi1> to vector<64x32xi32>
    %24 = arith.sitofp %23 : vector<64x32xi32> to vector<64x32xf32>
    %25 = arith.addf %17, %24 : vector<64x32xf32>
    %26 = vector.extract_strided_slice %7 {offsets = [0, 2], sizes = [64, 1], strides = [1, 1]} : vector<64x4xi32> to vector<64x1xi32>
    %c16_i32 = arith.constant 16 : i32
    %27 = vector.broadcast %c16_i32 : i32 to vector<64x1xi32>
    %28 = arith.addi %26, %27 : vector<64x1xi32>
    %29 = vector.broadcast %28 : vector<64x1xi32> to vector<64x32xi32>
    %30 = arith.cmpi eq, %8, %29 : vector<64x32xi32>
    %31 = arith.extui %30 : vector<64x32xi1> to vector<64x32xi32>
    %32 = arith.sitofp %31 : vector<64x32xi32> to vector<64x32xf32>
    %33 = arith.addf %25, %32 : vector<64x32xf32>
    %34 = vector.extract_strided_slice %7 {offsets = [0, 3], sizes = [64, 1], strides = [1, 1]} : vector<64x4xi32> to vector<64x1xi32>
    %c24_i32 = arith.constant 24 : i32
    %35 = vector.broadcast %c24_i32 : i32 to vector<64x1xi32>
    %36 = arith.addi %34, %35 : vector<64x1xi32>
    %37 = vector.broadcast %36 : vector<64x1xi32> to vector<64x32xi32>
    %38 = arith.cmpi eq, %8, %37 : vector<64x32xi32>
    %39 = arith.extui %38 : vector<64x32xi1> to vector<64x32xi32>
    %40 = arith.sitofp %39 : vector<64x32xi32> to vector<64x32xf32>
    %41 = arith.addf %33, %40 : vector<64x32xf32>
    %c0_3 = arith.constant 0 : index
    %c0_4 = arith.constant 0 : index
    %42 = vector.load %arg2[%c0_3, %c0_4] : memref<32x128xf32, #tpu.memory_space<vmem>>, vector<32x128xf32>
    %cst_5 = arith.constant dense<0.000000e+00> : vector<64x128xf32>
    %43 = tpu.matmul %41, %42, %cst_5 {dimension_numbers = #tpu.dot_dimension_numbers<[1], [0], [0], [1], [0, 0, 1, 1], [], []>} : vector<64x32xf32>, vector<32x128xf32>, vector<64x128xf32> -> vector<64x128xf32>
    %c0_6 = arith.constant 0 : index
    %c0_7 = arith.constant 0 : index
    %44 = vector.load %arg3[%c0_6, %c0_7] : memref<64x128xf32, #tpu.memory_space<vmem>>, vector<64x128xf32>
    tpu.vector_store %arg3[%c0_6, %c0_7], %43 {strides = array<i32>} : memref<64x128xf32, #tpu.memory_space<vmem>>, vector<64x128xf32>,
    return
  }
  func.func @transform_0(%arg0: i32) -> (i32, i32) {
    %c0_i32 = arith.constant 0 : i32
    %c0_i32_0 = arith.constant 0 : i32
    return %arg0, %c0_i32 : i32, i32
  }
  func.func @transform_1(%arg0: i32) -> (i32, i32) {
    %c0_i32 = arith.constant 0 : i32
    %c0_i32_0 = arith.constant 0 : i32
    %c0_i32_1 = arith.constant 0 : i32
    return %c0_i32, %c0_i32_0 : i32, i32
  }
  func.func @transform_2(%arg0: i32) -> (i32, i32) {
    %c0_i32 = arith.constant 0 : i32
    %c0_i32_0 = arith.constant 0 : i32
    return %arg0, %c0_i32 : i32, i32
  }
}

</mosaic_0001>

<llo_original>
// kernel: tpu_custom_call.1
$region0: #{tpu_custom_call.1}
  #allocation0 [shape = 'u32[]', space=smem, size = 0x4, offset = 0x4, fixed_abs, tag = 'smem constant byte address 0x4 - core index']
  #allocation1 [shape = 'u32[144,128]{1,0:T(1,128)}', space=vmem, size = 0x12000, scoped, tag = 'internal scratch']
  %s0 = inlined_call_operand.vmem [shape: f32[128,4], index: 0, kind: input, shape index: {}]
  %s1 = inlined_call_operand.vmem [shape: f32[32,128], index: 1, kind: input, shape index: {}]
  %s2 = inlined_call_operand.hbm [shape: f32[128,128], index: 2, kind: output, shape index: {}]
  %s3 = sld [smem:[#allocation0]]
  $region41: #{tpu_custom_call.1} parent=0
    _
  %s5 = ssub.s32 1, %s3
  %s6 = scalar_select 0, %s5, %s3
  $region1: #{tpu_custom_call.1} parent=0
    #allocation2 [shape = 'u8[65536]{0}', space=vmem, size = 0x10000, scoped, tag = 'output window, operand 0']
    #allocation3 [shape = 's32[2]{0}', space=sflag, size = 0x8, scoped, tag = 'scoped memory for tpu_custom_call.1']
    %7 = vsyncpa [#allocation3], 0
    %s8 = scalar_lea.sflag [#allocation3], 1
    %9 = vsyncpa %s8, 0
    loop: start=0, step=1, limit=4
    $region2: #{tpu_custom_call.1} parent=1 // loop_pre_header
      _
    $region3: #{tpu_custom_call.1} parent=1 // loop_header
      %s11 = sphi 0, %s15
      %p12 = scmp.ge.s32.totalorder %s11, 4
      %s21 = sphi 0, %s23
      %s24 = sphi 0, %s21
      %s25 = sphi 0, %s24
      %s41 = sphi 0, %s25
      %s45 = sphi 0, %s45
      %s47 = sphi 0, %s45
      %s48 = sphi 0, %s47
      %s62 = sphi 0, %s48
      %s68 = sphi 0, %s70
      %s71 = sphi 0, %s68
      %s72 = sphi 0, %s71
      %s88 = sphi 0, %s72
    $region4: #{tpu_custom_call.1} parent=1 // loop_header_branch
      %14 = sbr.rel (%p12) target = $region8
    $region5: #{tpu_custom_call.1} parent=1 // loop_body
      %s16 = ssub.s32 %s11, 1
      %s17 = ssub.s32 %s11, 2
      %s18 = sadd.s32 %s11, 1
      %s19 = ssub.s32 %s11, %s18
      %p20 = scmp.eq.s32.totalorder %s19, 0
      %s22 = sadd.s32 %s21, 1
      %s23 = scalar_select %p20, %s21, %s22
      %p26 = pneg %p20
      %p27 = scmp.eq.s32.totalorder %s11, 1
      %p28 = por %p26, %p27
      %p29 = scmp.ne.s32.totalorder %s21, %s24
      %p30 = scmp.eq.s32.totalorder %s11, 0
      %p31 = por %p29, %p30
      %p32 = scmp.ne.s32.totalorder %s21, %s24
      %p33 = scmp.eq.s32.totalorder %s16, 1
      %p34 = por %p32, %p33
      %p35 = scmp.ne.s32.totalorder %s24, %s25
      %p36 = scmp.eq.s32.totalorder %s16, 0
      %p37 = por %p35, %p36
      %p38 = scmp.ne.s32.totalorder %s24, %s25
      %p39 = scmp.eq.s32.totalorder %s17, 1
      %p40 = por %p38, %p39
      %p42 = scmp.ne.s32.totalorder %s25, %s41
      %p43 = scmp.eq.s32.totalorder %s17, 0
      %p44 = por %p42, %p43
      %s46 = sadd.s32 %s45, 1
      %p49 = scmp.eq.s32.totalorder %s11, 1
      %p50 = scmp.ne.s32.totalorder %s45, %s47
      %p51 = scmp.eq.s32.totalorder %s11, 0
      %p52 = por %p50, %p51
      %p53 = scmp.ne.s32.totalorder %s45, %s47
      %p54 = scmp.eq.s32.totalorder %s16, 1
      %p55 = por %p53, %p54
      %p56 = scmp.ne.s32.totalorder %s47, %s48
      %p57 = scmp.eq.s32.totalorder %s16, 0
      %p58 = por %p56, %p57
      %p59 = scmp.ne.s32.totalorder %s47, %s48
      %p60 = scmp.eq.s32.totalorder %s17, 1
      %p61 = por %p59, %p60
      %p63 = scmp.ne.s32.totalorder %s48, %s62
      %p64 = scmp.eq.s32.totalorder %s17, 0
      %p65 = por %p63, %p64
      %s66 = ssub.s32 %s11, %s18
      %p67 = scmp.eq.s32.totalorder %s66, 0
      %s69 = sadd.s32 %s68, 1
      %s70 = scalar_select %p67, %s68, %s69
      %p73 = pneg %p67
      %p74 = scmp.eq.s32.totalorder %s11, 1
      %p75 = por %p73, %p74
      %p76 = scmp.ne.s32.totalorder %s68, %s71
      %p77 = scmp.eq.s32.totalorder %s11, 0
      %p78 = por %p76, %p77
      %p79 = scmp.ne.s32.totalorder %s68, %s71
      %p80 = scmp.eq.s32.totalorder %s16, 1
      %p81 = por %p79, %p80
      %p82 = scmp.ne.s32.totalorder %s71, %s72
      %p83 = scmp.eq.s32.totalorder %s16, 0
      %p84 = por %p82, %p83
      %p85 = scmp.ne.s32.totalorder %s71, %s72
      %p86 = scmp.eq.s32.totalorder %s17, 1
      %p87 = por %p85, %p86
      %p89 = scmp.ne.s32.totalorder %s72, %s88
      %p90 = scmp.eq.s32.totalorder %s17, 0
      %p91 = por %p89, %p90
      %p92 = scmp.le.s32.totalorder 1, %s11
      %p93 = scmp.lt.s32.totalorder %s11, 3
      %p94 = pnand %p92, %p93
      %p95 = pneg %p94
      // Predicated region
      $region9: #{tpu_custom_call.1} parent=5 // pred_check
        _
      $region10: #{tpu_custom_call.1} parent=5 // pred_check_branch
        %97 = sbr.rel (%p94) target = $region12
      $region11: #{tpu_custom_call.1} parent=5 // pred_region
        %s98 = ssub.s32 %s11, 1
        // Predicated region
        $region13: #{tpu_custom_call.1} parent=11 // pred_check
          %p99 = pneg %p58
        $region14: #{tpu_custom_call.1} parent=11 // pred_check_branch
          %101 = sbr.rel (%p99) target = $region16
        $region15: #{tpu_custom_call.1} parent=11 // pred_region
          _
        $region16: #{tpu_custom_call.1} parent=11 // pred_fallthru
          _
      $region12: #{tpu_custom_call.1} parent=5 // pred_fallthru
        _
      %p102 = scmp.lt.s32.totalorder %s11, 2
      // Predicated region
      $region17: #{tpu_custom_call.1} parent=5 // pred_check
        %p103 = pneg %p102
      $region18: #{tpu_custom_call.1} parent=5 // pred_check_branch
        %105 = sbr.rel (%p103) target = $region20
      $region19: #{tpu_custom_call.1} parent=5 // pred_region
        // Predicated region
        $region21: #{tpu_custom_call.1} parent=19 // pred_check
          %p106 = pneg %p31
        $region22: #{tpu_custom_call.1} parent=19 // pred_check_branch
          %108 = sbr.rel (%p106) target = $region24
        $region23: #{tpu_custom_call.1} parent=19 // pred_region
          %s109 = smul.u32 8, %s11
          %p110 = scmp.lt.s32.totalorder %s109, 15
          %s111 = scalar_select %p110, %s109, 15
          %s112 = smul.addr %s111, 8
          %s113 = scalar_lea.vmem %s0, %s112
          %s114 = smul.u32 8, %s11
        $region24: #{tpu_custom_call.1} parent=19 // pred_fallthru
          _
      $region20: #{tpu_custom_call.1} parent=5 // pred_fallthru
        _
      %p115 = scmp.le.s32.totalorder 1, %s11
      %p116 = scmp.lt.s32.totalorder %s11, 3
      %p117 = pnand %p115, %p116
      %p118 = pneg %p117
      // Predicated region
      $region25: #{tpu_custom_call.1} parent=5 // pred_check
        _
      $region26: #{tpu_custom_call.1} parent=5 // pred_check_branch
        %120 = sbr.rel (%p117) target = $region28
      $region27: #{tpu_custom_call.1} parent=5 // pred_region
        %s121 = ssub.s32 %s11, 1
        %s122 = smul.u32 8, %s16
        %p123 = scmp.lt.s32.totalorder %s122, 15
        %s124 = scalar_select %p123, %s122, 15
        %s125 = smul.addr %s124, 8
        %s126 = scalar_lea.vmem %s0, %s125
        %p127 = pneg %p37
        %p128 = pneg %p34
        %p129 = pneg %p58
        %p130 = pneg %p55
        %p131 = pneg %p84
        %p132 = pneg %p81
        %s133 = sand.u32 %s71, 1
        %s134 = scalar_lea.sflag [#allocation3], %s133
        %s135 = sand.u32 %s71, 1
        %s136 = smul.addr %s135, 64
        %s137 = scalar_lea.vmem [#allocation2], %s136
        %s138 = smul.u32 8, %s16
        %p139 = scmp.lt.s32.totalorder %s138, 15
        %s140 = scalar_select %p139, %s138, 15
        %s141 = smul.addr %s140, 8
        %s142 = scalar_lea.vmem %s0, %s141
        %s143 = smul.u32 8, %s16
        %s144 = smul.u32 8, %s16
        %v145 = vld [vmem:[%s142] sm:$0xff]
        %v146 = vld [vmem:[%s142 + $0x8] sm:$0xff]
        %v147 = vld [vmem:[%s142 + $0x10] sm:$0xff]
        %v148 = vld [vmem:[%s142 + $0x18] sm:$0xff]
        %v149 = vld [vmem:[%s142 + $0x20] sm:$0xff]
        %v150 = vld [vmem:[%s142 + $0x28] sm:$0xff]
        %v151 = vld [vmem:[%s142 + $0x30] sm:$0xff]
        %v152 = vld [vmem:[%s142 + $0x38] sm:$0xff]
        %v153 = vmax.f32 %v145, 1.0
        %v154 = vmax.f32 %v146, 1.0
        %v155 = vmax.f32 %v147, 1.0
        %v156 = vmax.f32 %v148, 1.0
        %v157 = vmax.f32 %v149, 1.0
        %v158 = vmax.f32 %v150, 1.0
        %v159 = vmax.f32 %v151, 1.0
        %v160 = vmax.f32 %v152, 1.0
        %v161 = vmin.f32 %v153, 4.999999
        %v162 = vmin.f32 %v154, 4.999999
        %v163 = vmin.f32 %v155, 4.999999
        %v164 = vmin.f32 %v156, 4.999999
        %v165 = vmin.f32 %v157, 4.999999
        %v166 = vmin.f32 %v158, 4.999999
        %v167 = vmin.f32 %v159, 4.999999
        %v168 = vmin.f32 %v160, 4.999999
        %v169 = vcvt.f32.s32.to.zero.pseudo %v161
        %v170 = vcvt.f32.s32.to.zero.pseudo %v162
        %v171 = vcvt.f32.s32.to.zero.pseudo %v163
        %v172 = vcvt.f32.s32.to.zero.pseudo %v164
        %v173 = vcvt.f32.s32.to.zero.pseudo %v165
        %v174 = vcvt.f32.s32.to.zero.pseudo %v166
        %v175 = vcvt.f32.s32.to.zero.pseudo %v167
        %v176 = vcvt.f32.s32.to.zero.pseudo %v168
        %v177 = vsub.s32 %v169, 1
        %v178 = vsub.s32 %v170, 1
        %v179 = vsub.s32 %v171, 1
        %v180 = vsub.s32 %v172, 1
        %v181 = vsub.s32 %v173, 1
        %v182 = vsub.s32 %v174, 1
        %v183 = vsub.s32 %v175, 1
        %v184 = vsub.s32 %v176, 1
        %v185 = vlaneseq
        %v186 = vand.u32 %v185, 127
        %187 = vset.pattern.permute.xlu0 0
        %188 = vperm.xlu0 %187, %v177
        %v189 = vpop.permute.xlu0 %188
        %190 = vset.pattern.permute.xlu0 0
        %191 = vperm.xlu0 %190, %v178
        %v192 = vpop.permute.xlu0 %191
        %193 = vset.pattern.permute.xlu0 0
        %194 = vperm.xlu0 %193, %v179
        %v195 = vpop.permute.xlu0 %194
        %196 = vset.pattern.permute.xlu0 0
        %197 = vperm.xlu0 %196, %v180
        %v198 = vpop.permute.xlu0 %197
        %199 = vset.pattern.permute.xlu0 0
        %200 = vperm.xlu0 %199, %v181
        %v201 = vpop.permute.xlu0 %200
        %202 = vset.pattern.permute.xlu0 0
        %203 = vperm.xlu0 %202, %v182
        %v204 = vpop.permute.xlu0 %203
        %205 = vset.pattern.permute.xlu0 0
        %206 = vperm.xlu0 %205, %v183
        %v207 = vpop.permute.xlu0 %206
        %208 = vset.pattern.permute.xlu0 0
        %209 = vperm.xlu0 %208, %v184
        %v210 = vpop.permute.xlu0 %209
        %vm211 = vcmp.eq.s32.totalorder %v186, %v189
        %vm212 = vcmp.eq.s32.totalorder %v186, %v192
        %vm213 = vcmp.eq.s32.totalorder %v186, %v195
        %vm214 = vcmp.eq.s32.totalorder %v186, %v198
        %vm215 = vcmp.eq.s32.totalorder %v186, %v201
        %vm216 = vcmp.eq.s32.totalorder %v186, %v204
        %vm217 = vcmp.eq.s32.totalorder %v186, %v207
        %vm218 = vcmp.eq.s32.totalorder %v186, %v210
        %v219 = vsel %vm211, 1, 0
        %v220 = vsel %vm212, 1, 0
        %v221 = vsel %vm213, 1, 0
        %v222 = vsel %vm214, 1, 0
        %v223 = vsel %vm215, 1, 0
        %v224 = vsel %vm216, 1, 0
        %v225 = vsel %vm217, 1, 0
        %v226 = vsel %vm218, 1, 0
        %v227 = vcvt.s32.f32 %v219
        %v228 = vcvt.s32.f32 %v220
        %v229 = vcvt.s32.f32 %v221
        %v230 = vcvt.s32.f32 %v222
        %v231 = vcvt.s32.f32 %v223
        %v232 = vcvt.s32.f32 %v224
        %v233 = vcvt.s32.f32 %v225
        %v234 = vcvt.s32.f32 %v226
        %v235 = vadd.f32 %v227, 0.0
        %v236 = vadd.f32 %v228, 0.0
        %v237 = vadd.f32 %v229, 0.0
        %v238 = vadd.f32 %v230, 0.0
        %v239 = vadd.f32 %v231, 0.0
        %v240 = vadd.f32 %v232, 0.0
        %v241 = vadd.f32 %v233, 0.0
        %v242 = vadd.f32 %v234, 0.0
        %v243 = vadd.s32 %v177, 8
        %v244 = vadd.s32 %v178, 8
        %v245 = vadd.s32 %v179, 8
        %v246 = vadd.s32 %v180, 8
        %v247 = vadd.s32 %v181, 8
        %v248 = vadd.s32 %v182, 8
        %v249 = vadd.s32 %v183, 8
        %v250 = vadd.s32 %v184, 8
        %251 = vset.pattern.permute.xlu0 1
        %252 = vperm.xlu0 %251, %v243
        %v253 = vpop.permute.xlu0 %252
        %254 = vset.pattern.permute.xlu0 1
        %255 = vperm.xlu0 %254, %v244
        %v256 = vpop.permute.xlu0 %255
        %257 = vset.pattern.permute.xlu0 1
        %258 = vperm.xlu0 %257, %v245
        %v259 = vpop.permute.xlu0 %258
        %260 = vset.pattern.permute.xlu0 1
        %261 = vperm.xlu0 %260, %v246
        %v262 = vpop.permute.xlu0 %261
        %263 = vset.pattern.permute.xlu0 1
        %264 = vperm.xlu0 %263, %v247
        %v265 = vpop.permute.xlu0 %264
        %266 = vset.pattern.permute.xlu0 1
        %267 = vperm.xlu0 %266, %v248
        %v268 = vpop.permute.xlu0 %267
        %269 = vset.pattern.permute.xlu0 1
        %270 = vperm.xlu0 %269, %v249
        %v271 = vpop.permute.xlu0 %270
        %272 = vset.pattern.permute.xlu0 1
        %273 = vperm.xlu0 %272, %v250
        %v274 = vpop.permute.xlu0 %273
        %vm275 = vcmp.eq.s32.totalorder %v186, %v253
        %vm276 = vcmp.eq.s32.totalorder %v186, %v256
        %vm277 = vcmp.eq.s32.totalorder %v186, %v259
        %vm278 = vcmp.eq.s32.totalorder %v186, %v262
        %vm279 = vcmp.eq.s32.totalorder %v186, %v265
        %vm280 = vcmp.eq.s32.totalorder %v186, %v268
        %vm281 = vcmp.eq.s32.totalorder %v186, %v271
        %vm282 = vcmp.eq.s32.totalorder %v186, %v274
        %v283 = vsel %vm275, 1, 0
        %v284 = vsel %vm276, 1, 0
        %v285 = vsel %vm277, 1, 0
        %v286 = vsel %vm278, 1, 0
        %v287 = vsel %vm279, 1, 0
        %v288 = vsel %vm280, 1, 0
        %v289 = vsel %vm281, 1, 0
        %v290 = vsel %vm282, 1, 0
        %v291 = vcvt.s32.f32 %v283
        %v292 = vcvt.s32.f32 %v284
        %v293 = vcvt.s32.f32 %v285
        %v294 = vcvt.s32.f32 %v286
        %v295 = vcvt.s32.f32 %v287
        %v296 = vcvt.s32.f32 %v288
        %v297 = vcvt.s32.f32 %v289
        %v298 = vcvt.s32.f32 %v290
        %v299 = vadd.f32 %v235, %v291
        %v300 = vadd.f32 %v236, %v292
        %v301 = vadd.f32 %v237, %v293
        %v302 = vadd.f32 %v238, %v294
        %v303 = vadd.f32 %v239, %v295
        %v304 = vadd.f32 %v240, %v296
        %v305 = vadd.f32 %v241, %v297
        %v306 = vadd.f32 %v242, %v298
        %v307 = vadd.s32 %v177, 16
        %v308 = vadd.s32 %v178, 16
        %v309 = vadd.s32 %v179, 16
        %v310 = vadd.s32 %v180, 16
        %v311 = vadd.s32 %v181, 16
        %v312 = vadd.s32 %v182, 16
        %v313 = vadd.s32 %v183, 16
        %v314 = vadd.s32 %v184, 16
        %315 = vset.pattern.permute.xlu0 2
        %316 = vperm.xlu0 %315, %v307
        %v317 = vpop.permute.xlu0 %316
        %318 = vset.pattern.permute.xlu0 2
        %319 = vperm.xlu0 %318, %v308
        %v320 = vpop.permute.xlu0 %319
        %321 = vset.pattern.permute.xlu0 2
        %322 = vperm.xlu0 %321, %v309
        %v323 = vpop.permute.xlu0 %322
        %324 = vset.pattern.permute.xlu0 2
        %325 = vperm.xlu0 %324, %v310
        %v326 = vpop.permute.xlu0 %325
        %327 = vset.pattern.permute.xlu0 2
        %328 = vperm.xlu0 %327, %v311
        %v329 = vpop.permute.xlu0 %328
        %330 = vset.pattern.permute.xlu0 2
        %331 = vperm.xlu0 %330, %v312
        %v332 = vpop.permute.xlu0 %331
        %333 = vset.pattern.permute.xlu0 2
        %334 = vperm.xlu0 %333, %v313
        %v335 = vpop.permute.xlu0 %334
        %336 = vset.pattern.permute.xlu0 2
        %337 = vperm.xlu0 %336, %v314
        %v338 = vpop.permute.xlu0 %337
        %vm339 = vcmp.eq.s32.totalorder %v186, %v317
        %vm340 = vcmp.eq.s32.totalorder %v186, %v320
        %vm341 = vcmp.eq.s32.totalorder %v186, %v323
        %vm342 = vcmp.eq.s32.totalorder %v186, %v326
        %vm343 = vcmp.eq.s32.totalorder %v186, %v329
        %vm344 = vcmp.eq.s32.totalorder %v186, %v332
        %vm345 = vcmp.eq.s32.totalorder %v186, %v335
        %vm346 = vcmp.eq.s32.totalorder %v186, %v338
        %v347 = vsel %vm339, 1, 0
        %v348 = vsel %vm340, 1, 0
        %v349 = vsel %vm341, 1, 0
        %v350 = vsel %vm342, 1, 0
        %v351 = vsel %vm343, 1, 0
        %v352 = vsel %vm344, 1, 0
        %v353 = vsel %vm345, 1, 0
        %v354 = vsel %vm346, 1, 0
        %v355 = vcvt.s32.f32 %v347
        %v356 = vcvt.s32.f32 %v348
        %v357 = vcvt.s32.f32 %v349
        %v358 = vcvt.s32.f32 %v350
        %v359 = vcvt.s32.f32 %v351
        %v360 = vcvt.s32.f32 %v352
        %v361 = vcvt.s32.f32 %v353
        %v362 = vcvt.s32.f32 %v354
        %v363 = vadd.f32 %v299, %v355
        %v364 = vadd.f32 %v300, %v356
        %v365 = vadd.f32 %v301, %v357
        %v366 = vadd.f32 %v302, %v358
        %v367 = vadd.f32 %v303, %v359
        %v368 = vadd.f32 %v304, %v360
        %v369 = vadd.f32 %v305, %v361
        %v370 = vadd.f32 %v306, %v362
        %v371 = vadd.s32 %v177, 24
        %v372 = vadd.s32 %v178, 24
        %v373 = vadd.s32 %v179, 24
        %v374 = vadd.s32 %v180, 24
        %v375 = vadd.s32 %v181, 24
        %v376 = vadd.s32 %v182, 24
        %v377 = vadd.s32 %v183, 24
        %v378 = vadd.s32 %v184, 24
        %379 = vset.pattern.permute.xlu0 3
        %380 = vperm.xlu0 %379, %v371
        %v381 = vpop.permute.xlu0 %380
        %382 = vset.pattern.permute.xlu0 3
        %383 = vperm.xlu0 %382, %v372
        %v384 = vpop.permute.xlu0 %383
        %385 = vset.pattern.permute.xlu0 3
        %386 = vperm.xlu0 %385, %v373
        %v387 = vpop.permute.xlu0 %386
        %388 = vset.pattern.permute.xlu0 3
        %389 = vperm.xlu0 %388, %v374
        %v390 = vpop.permute.xlu0 %389
        %391 = vset.pattern.permute.xlu0 3
        %392 = vperm.xlu0 %391, %v375
        %v393 = vpop.permute.xlu0 %392
        %394 = vset.pattern.permute.xlu0 3
        %395 = vperm.xlu0 %394, %v376
        %v396 = vpop.permute.xlu0 %395
        %397 = vset.pattern.permute.xlu0 3
        %398 = vperm.xlu0 %397, %v377
        %v399 = vpop.permute.xlu0 %398
        %400 = vset.pattern.permute.xlu0 3
        %401 = vperm.xlu0 %400, %v378
        %v402 = vpop.permute.xlu0 %401
        %vm403 = vcmp.eq.s32.totalorder %v186, %v381
        %vm404 = vcmp.eq.s32.totalorder %v186, %v384
        %vm405 = vcmp.eq.s32.totalorder %v186, %v387
        %vm406 = vcmp.eq.s32.totalorder %v186, %v390
        %vm407 = vcmp.eq.s32.totalorder %v186, %v393
        %vm408 = vcmp.eq.s32.totalorder %v186, %v396
        %vm409 = vcmp.eq.s32.totalorder %v186, %v399
        %vm410 = vcmp.eq.s32.totalorder %v186, %v402
        %v411 = vsel %vm403, 1, 0
        %v412 = vsel %vm404, 1, 0
        %v413 = vsel %vm405, 1, 0
        %v414 = vsel %vm406, 1, 0
        %v415 = vsel %vm407, 1, 0
        %v416 = vsel %vm408, 1, 0
        %v417 = vsel %vm409, 1, 0
        %v418 = vsel %vm410, 1, 0
        %v419 = vcvt.s32.f32 %v411
        %v420 = vcvt.s32.f32 %v412
        %v421 = vcvt.s32.f32 %v413
        %v422 = vcvt.s32.f32 %v414
        %v423 = vcvt.s32.f32 %v415
        %v424 = vcvt.s32.f32 %v416
        %v425 = vcvt.s32.f32 %v417
        %v426 = vcvt.s32.f32 %v418
        %v427 = vadd.f32 %v363, %v419
        %v428 = vadd.f32 %v364, %v420
        %v429 = vadd.f32 %v365, %v421
        %v430 = vadd.f32 %v366, %v422
        %v431 = vadd.f32 %v367, %v423
        %v432 = vadd.f32 %v368, %v424
        %v433 = vadd.f32 %v369, %v425
        %v434 = vadd.f32 %v370, %v426
        %v435 = vld [vmem:[%s1] sm:$0xff]
        %v436 = vld [vmem:[%s1 + $0x8] sm:$0xff]
        %v437 = vld [vmem:[%s1 + $0x10] sm:$0xff]
        %v438 = vld [vmem:[%s1 + $0x18] sm:$0xff]
        %vm439 = vcmask 261120
        %v441 = vsel %vm439, %v427, 0
        %v444 = vsel %vm439, %v428, 0
        %v447 = vsel %vm439, %v429, 0
        %v450 = vsel %vm439, %v430, 0
        %v453 = vsel %vm439, %v431, 0
        %v456 = vsel %vm439, %v432, 0
        %v459 = vsel %vm439, %v433, 0
        %v462 = vsel %vm439, %v434, 0
        %464 = vmatprep.subr.mxu0 0.0
        %465 = vmatpush1.msra.mxu0 %v435
        %466 = vmatprep.subr.mxu0 0.0
        %467 = vmatpush1.msra.mxu0 %v436
        %468 = vmatprep.subr.mxu0 0.0
        %469 = vmatpush1.msra.mxu0 %v437
        %470 = vmatprep.subr.mxu0 0.0
        %471 = vmatpush1.msra.mxu0 %v438
        %472 = vmatprep.subr.mxu0 0.0
        %473 = vmatpush1.msra.mxu0 0.0
        %474 = vmatprep.subr.mxu0 0.0
        %475 = vmatpush1.msra.mxu0 0.0
        %476 = vmatprep.subr.mxu0 0.0
        %477 = vmatpush1.msra.mxu0 0.0
        %478 = vmatprep.subr.mxu0 0.0
        %479 = vmatpush1.msra.mxu0 0.0
        %480 = vmatprep.subr.mxu0 0.0
        %481 = vmatpush1.msra.mxu0 0.0
        %482 = vmatprep.subr.mxu0 0.0
        %483 = vmatpush1.msra.mxu0 0.0
        %484 = vmatprep.subr.mxu0 0.0
        %485 = vmatpush1.msra.mxu0 0.0
        %486 = vmatprep.subr.mxu0 0.0
        %487 = vmatpush1.msra.mxu0 0.0
        %488 = vmatprep.subr.mxu0 0.0
        %489 = vmatpush1.msra.mxu0 0.0
        %490 = vmatprep.subr.mxu0 0.0
        %491 = vmatpush1.msra.mxu0 0.0
        %492 = vmatprep.subr.mxu0 0.0
        %493 = vmatpush1.msra.mxu0 0.0
        %494 = vmatprep.subr.mxu0 0.0
        %495 = vmatpush1.msra.mxu0 0.0
        %496 = vmatprep.subr.mxu0 0.0
        %497 = vmatpush1.msra.mxu0 0.0
        %498 = vmatprep.subr.mxu0 0.0
        %499 = vmatpush1.msra.mxu0 0.0
        %500 = vmatprep.subr.mxu0 0.0
        %501 = vmatpush1.msra.mxu0 0.0
        %502 = vmatprep.subr.mxu0 0.0
        %503 = vmatpush1.msra.mxu0 0.0
        %504 = vmatprep.subr.mxu0 0.0
        %505 = vmatpush1.msra.mxu0 0.0
        %506 = vmatprep.subr.mxu0 0.0
        %507 = vmatpush1.msra.mxu0 0.0
        %508 = vmatprep.subr.mxu0 0.0
        %509 = vmatpush1.msra.mxu0 0.0
        %510 = vmatprep.subr.mxu0 0.0
        %511 = vmatpush1.msra.mxu0 0.0
        %512 = vmatprep.subr.mxu0 0.0
        %513 = vmatpush1.msra.mxu0 0.0
        %514 = vmatprep.subr.mxu0 0.0
        %515 = vmatpush1.msra.mxu0 0.0
        %516 = vmatprep.subr.mxu0 0.0
        %517 = vmatpush1.msra.mxu0 0.0
        %518 = vmatprep.subr.mxu0 0.0
        %519 = vmatpush1.msra.mxu0 0.0
        %520 = vmatprep.subr.mxu0 0.0
        %521 = vmatpush1.msra.mxu0 0.0
        %522 = vmatprep.subr.mxu0 0.0
        %523 = vmatpush1.msra.mxu0 0.0
        %524 = vmatprep.subr.mxu0 0.0
        %525 = vmatpush1.msra.mxu0 0.0
        %526 = vmatprep.subr.mxu0 0.0
        %527 = vmatpush1.msra.mxu0 0.0
        %528 = vmatprep.mubr.f32.mxu0 0.0
        %529 = vmatmul.mubr.f32.gmra.mrb[0].mxu0 %v441
        %v530 = vpop.f32.mrb[0].mxu0
        %v531 = vadd.f32 0.0, %v530
        %v532 = vpop.f32.mrb[0].mxu0
        %533 = vmatprep.mubr.f32.mxu0 0.0
        %534 = vmatmul.mubr.f32.gmra.mrb[0].mxu0 %v444
        %v535 = vpop.f32.mrb[0].mxu0
        %v536 = vadd.f32 0.0, %v535
        %v537 = vpop.f32.mrb[0].mxu0
        %538 = vmatprep.mubr.f32.mxu0 0.0
        %539 = vmatmul.mubr.f32.gmra.mrb[0].mxu0 %v447
        %v540 = vpop.f32.mrb[0].mxu0
        %v541 = vadd.f32 0.0, %v540
        %v542 = vpop.f32.mrb[0].mxu0
        %543 = vmatprep.mubr.f32.mxu0 0.0
        %544 = vmatmul.mubr.f32.gmra.mrb[0].mxu0 %v450
        %v545 = vpop.f32.mrb[0].mxu0
        %v546 = vadd.f32 0.0, %v545
        %v547 = vpop.f32.mrb[0].mxu0
        %548 = vmatprep.mubr.f32.mxu0 0.0
        %549 = vmatmul.mubr.f32.gmra.mrb[0].mxu0 %v453
        %v550 = vpop.f32.mrb[0].mxu0
        %v551 = vadd.f32 0.0, %v550
        %v552 = vpop.f32.mrb[0].mxu0
        %553 = vmatprep.mubr.f32.mxu0 0.0
        %554 = vmatmul.mubr.f32.gmra.mrb[0].mxu0 %v456
        %v555 = vpop.f32.mrb[0].mxu0
        %v556 = vadd.f32 0.0, %v555
        %v557 = vpop.f32.mrb[0].mxu0
        %558 = vmatprep.mubr.f32.mxu0 0.0
        %559 = vmatmul.mubr.f32.gmra.mrb[0].mxu0 %v459
        %v560 = vpop.f32.mrb[0].mxu0
        %v561 = vadd.f32 0.0, %v560
        %v562 = vpop.f32.mrb[0].mxu0
        %563 = vmatprep.mubr.f32.mxu0 0.0
        %564 = vmatmul.mubr.f32.gmra.mrb[0].mxu0 %v462
        %v565 = vpop.f32.mrb[0].mxu0
        %v566 = vadd.f32 0.0, %v565
        %v567 = vpop.f32.mrb[0].mxu0
        %568 = vdwg.mxu0
        %569 = vst [vmem:[%s137] sm:$0xff] %v531
        %570 = vst [vmem:[%s137 + $0x8] sm:$0xff] %v536
        %571 = vst [vmem:[%s137 + $0x10] sm:$0xff] %v541
        %572 = vst [vmem:[%s137 + $0x18] sm:$0xff] %v546
        %573 = vst [vmem:[%s137 + $0x20] sm:$0xff] %v551
        %574 = vst [vmem:[%s137 + $0x28] sm:$0xff] %v556
        %575 = vst [vmem:[%s137 + $0x30] sm:$0xff] %v561
        %576 = vst [vmem:[%s137 + $0x38] sm:$0xff] %v566
        %s577 = sand.u32 %s71, 1
        %s578 = scalar_lea.sflag [#allocation3], %s577
        %s579 = sand.u32 %s71, 1
        %s580 = smul.addr %s579, 64
        %s581 = scalar_lea.vmem [#allocation2], %s580
        // Predicated region
        $region29: #{tpu_custom_call.1} parent=27 // pred_check
          %p582 = pneg %p81
        $region30: #{tpu_custom_call.1} parent=27 // pred_check_branch
          %584 = sbr.rel (%p582) target = $region32
        $region31: #{tpu_custom_call.1} parent=27 // pred_region
          %s585 = smul.u32 8, %s16
          %s587 = ssub.s32 1024, 1024
          %588 = vsyncadd %s578, %s587
          %s589 = smul.addr %s585, 128
          %s590 = scalar_lea.hbm %s2, %s589
          %s591 = sshll.u32 %s581, 4
          %s592 = int_to_ptr.vmem [resolvable:$true] %s591
          %597 = dma.vmem_to_hbm [thread:$0]  %s592, 1024, %s590, %s578, 128, 128, 8
        $region32: #{tpu_custom_call.1} parent=27 // pred_fallthru
          _
      $region28: #{tpu_custom_call.1} parent=5 // pred_fallthru
        _
      %p598 = scmp.le.s32.totalorder 2, %s11
      // Predicated region
      $region33: #{tpu_custom_call.1} parent=5 // pred_check
        %p599 = pneg %p598
      $region34: #{tpu_custom_call.1} parent=5 // pred_check_branch
        %601 = sbr.rel (%p599) target = $region36
      $region35: #{tpu_custom_call.1} parent=5 // pred_region
        %s602 = ssub.s32 %s11, 2
        // Predicated region
        $region37: #{tpu_custom_call.1} parent=35 // pred_check
          %p603 = pneg %p87
        $region38: #{tpu_custom_call.1} parent=35 // pred_check_branch
          %605 = sbr.rel (%p603) target = $region40
        $region39: #{tpu_custom_call.1} parent=35 // pred_region
          %s606 = sand.u32 %s72, 1
          %s607 = scalar_lea.sflag [#allocation3], %s606
          %s608 = sand.u32 %s72, 1
          %s609 = smul.addr %s608, 64
          %s610 = scalar_lea.vmem [#allocation2], %s609
          %611 = dma.done %s607, 1024
        $region40: #{tpu_custom_call.1} parent=35 // pred_fallthru
          _
      $region36: #{tpu_custom_call.1} parent=5 // pred_fallthru
        _
    $region6: #{tpu_custom_call.1} parent=1 // loop_footer
      %s15 = sadd.s32 1, %s11
    $region7: #{tpu_custom_call.1} parent=1 // loop_footer_branch
      %10 = sbr.rel target = $region3
    $region8: #{tpu_custom_call.1} parent=1 // loop_exit
      _
    %612 = vsyncpa [#allocation3], 1
    %s613 = scalar_lea.sflag [#allocation3], 1
    %614 = vsyncpa %s613, 1

</llo_original>
